<compile_context>
chip_gen: v7x
topology: tpu7x:2x2x1
jax: 0.10.0
libtpu: 0.0.40
codegen_flags: <defaults>
</compile_context>

<pallas_src>
import functools

import numpy as np
import jax
import jax.numpy as jnp
from jax.experimental import pallas as pl
from jax.experimental.pallas import tpu as pltpu


def _round_up(a, m):
    return (a + m - 1) // m * m


def _tdnn_fused_kernel(x_ref, w_ref, mask_ref, b_ref, o_ref, *, o_sum,
                       fast_path):
    """x_ref: [TN, L*E]  w_ref: [L*E, C]  mask_ref: [1, C]  b_ref: [1, O]
    o_ref: [TN, O]."""
    # One MXU matmul computes every (branch, time, channel) pre-activation.
    acc = jnp.dot(x_ref[...], w_ref[...],
                  preferred_element_type=jnp.float32)          # [TN, C]
    acc = acc + mask_ref[...]            # -1e30 on invalid / pad columns
    c = acc.shape[1]
    if fast_path:
        # Columns are (t, o) with o minor, C % 128 == 0, 128 % o_sum == 0.
        # Stage 1: elementwise max over aligned 128-lane column tiles (VPU).
        m = acc[:, :128]
        for j in range(1, c // 128):
            m = jnp.maximum(m, acc[:, j * 128:(j + 1) * 128])
        # Stage 2: fold the 128 // o_sum time-groups inside one lane tile.
        r = m[:, :o_sum]
        for q in range(1, 128 // o_sum):
            r = jnp.maximum(r, m[:, q * o_sum:(q + 1) * o_sum])
    else:
        # General fallback: plain slice-and-max over every time position.
        r = acc[:, :o_sum]
        for t in range(1, c // o_sum):
            r = jnp.maximum(r, acc[:, t * o_sum:(t + 1) * o_sum])
    # tanh is monotone -> apply bias + tanh after the max (per channel only).
    o_ref[...] = jnp.tanh(r + b_ref[...]).astype(o_ref.dtype)


def tdnn_forward(x, kernel_weights, biases, *, tile_n=512,
                 compute_dtype=jnp.bfloat16):
    """Full TDNN forward.

    x: [batch, seq_len, max_word_len, char_embed_size] (float32)
    kernel_weights: list of [out_dim, char_embed_size, kW] (PyTorch layout)
    biases: list of [out_dim]
    returns: [batch, seq_len, sum(out_dims)] float32
    """
    assert x.ndim == 4, 'Wrong input rank, must be 4'
    B, S, L, E = x.shape
    n_words = B * S
    out_dims = [int(w.shape[0]) for w in kernel_weights]
    widths = [int(w.shape[2]) for w in kernel_weights]
    o_sum = sum(out_dims)
    for w in kernel_weights:
        assert int(w.shape[1]) == E, 'char_embed_size mismatch'
    assert max(widths) <= L

    t_max = L - min(widths) + 1
    fast_path = (128 % o_sum == 0)
    c_cols = t_max * o_sum
    if fast_path:
        c_cols = _round_up(c_cols, 128)

    # ---- pack all branches into one block-banded weight matrix -----------
    # acc[n, t*o_sum + off_b + o] = sum_{e,k} x[n, (t+k)*E + e] * w_b[o, e, k]
    w_big = jnp.zeros((L * E, c_cols), jnp.float32)
    mask = np.full((1, c_cols), -1e30, np.float32)
    off = 0
    for w_b, o_b, kw_b in zip(kernel_weights, out_dims, widths):
        t_b = L - kw_b + 1
        for t in range(t_b):
            col = t * o_sum + off
            mask[0, col:col + o_b] = 0.0
            for k in range(kw_b):
                w_big = w_big.at[(t + k) * E:(t + k + 1) * E,
                                 col:col + o_b].set(
                    jnp.transpose(w_b[:, :, k]).astype(jnp.float32))
        off += o_b
    bias2 = jnp.concatenate([b.reshape(-1) for b in biases]).astype(
        jnp.float32).reshape(1, o_sum)

    # ---- lane-dense, low-precision x layout -------------------------------
    x2 = x.reshape(n_words, L * E).astype(compute_dtype)
    w_big = w_big.astype(compute_dtype)

    # ---- word tiling: big tiles, pad N, keep multi-tile grids even --------
    tile = max(16, min(int(tile_n), _round_up(n_words, 16)))
    tile = _round_up(tile, 16)
    if n_words > tile:
        n_pad = _round_up(n_words, 2 * tile)   # even grid -> both v7x cores
    else:
        n_pad = tile
    if n_pad != n_words:
        x2 = jnp.pad(x2, ((0, n_pad - n_words), (0, 0)))
    grid = n_pad // tile

    kernel = functools.partial(_tdnn_fused_kernel, o_sum=o_sum,
                               fast_path=fast_path)
    out = pl.pallas_call(
        kernel,
        out_shape=jax.ShapeDtypeStruct((n_pad, o_sum), jnp.float32),
        grid_spec=pltpu.PrefetchScalarGridSpec(
            num_scalar_prefetch=0,
            grid=(grid,),
            in_specs=[
                pl.BlockSpec((tile, L * E), lambda i: (i, 0)),
                pl.BlockSpec((L * E, c_cols), lambda i: (0, 0)),
                pl.BlockSpec((1, c_cols), lambda i: (0, 0)),
                pl.BlockSpec((1, o_sum), lambda i: (0, 0)),
            ],
            out_specs=pl.BlockSpec((tile, o_sum), lambda i: (i, 0)),
        ),
        compiler_params=pltpu.CompilerParams(
            dimension_semantics=("parallel",),
            vmem_limit_bytes=32 * 1024 * 1024),
    )(x2, w_big, jnp.asarray(mask), bias2)

    return out[:n_words].reshape(B, S, o_sum)


def tdnn_reference(x, kernel_weights, biases):
    """Pure-JAX reference mirroring the PyTorch forward (for validation)."""
    B, S, L, E = x.shape
    xw = x.reshape(B * S, L, E).astype(jnp.float32)
    outs = []
    for w, b in zip(kernel_weights, biases):
        O, _, kW = w.shape
        T = L - kW + 1
        acc = jnp.zeros((B * S, T, O), jnp.float32)
        for k in range(kW):
            acc = acc + jnp.einsum('nte,oe->nto', xw[:, k:k + T, :],
                                   w[:, :, k].astype(jnp.float32))
        outs.append(jnp.max(jnp.tanh(acc + b[None, None, :]), axis=1))
    return jnp.concatenate(outs, axis=1).reshape(B, S, -1)


if __name__ == "__main__":
    # Small deterministic config consistent with the module:
    # char_embed_size=16, max_word_len=12, kernels=[(kW, out_dim), ...]
    batch_size, seq_len = 2, 8
    max_word_len, char_embed_size = 12, 16
    kernels_cfg = [(1, 8), (2, 8), (3, 16)]       # depth_sum = 32

    key = jax.random.PRNGKey(0)
    kx, *kparams = jax.random.split(key, 1 + 2 * len(kernels_cfg))
    x = jax.random.normal(
        kx, (batch_size, seq_len, max_word_len, char_embed_size),
        dtype=jnp.float32)

    kernel_weights, biases = [], []
    for i, (kW, out_dim) in enumerate(kernels_cfg):
        kernel_weights.append(0.05 * jax.random.normal(
            kparams[2 * i], (out_dim, char_embed_size, kW), dtype=jnp.float32))
        biases.append(0.05 * jax.random.normal(
            kparams[2 * i + 1], (out_dim,), dtype=jnp.float32))

    fwd = jax.jit(tdnn_forward, static_argnames=("tile_n", "compute_dtype"))
    out = jax.block_until_ready(fwd(x, kernel_weights, biases))

    # Reference computed with the same bf16 quantization the kernel applies.
    xq = x.astype(jnp.bfloat16).astype(jnp.float32)
    wq = [w.astype(jnp.bfloat16).astype(jnp.float32) for w in kernel_weights]
    ref = tdnn_reference(xq, wq, biases)
    depth_sum = sum(o for _, o in kernels_cfg)
    assert out.shape == (batch_size, seq_len, depth_sum)
    assert jnp.allclose(out, ref, atol=2e-3, rtol=2e-3), (
        "Pallas TDNN mismatch: max abs err = "
        f"{float(jnp.max(jnp.abs(out - ref)))}")

    # Second check: non-divisible N -> exercises row padding + multi-tile grid.
    x_b = jax.random.normal(
        jax.random.PRNGKey(1), (3, 7, max_word_len, char_embed_size),
        dtype=jnp.float32)
    out_b = jax.block_until_ready(fwd(x_b, kernel_weights, biases, tile_n=16))
    ref_b = tdnn_reference(x_b.astype(jnp.bfloat16).astype(jnp.float32),
                           wq, biases)
    assert out_b.shape == (3, 7, depth_sum)
    assert jnp.allclose(out_b, ref_b, atol=2e-3, rtol=2e-3), (
        "Pallas TDNN mismatch (padded case): max abs err = "
        f"{float(jnp.max(jnp.abs(out_b - ref_b)))}")

    print("KERNEL_OK")
</pallas_src>

<mosaic_0001>
module attributes {stable_mosaic.version = 11 : i64} {
  func.func @_tdnn_fused_kernel(%arg0: i32, %arg1: memref<16x192xbf16, #tpu.memory_space<vmem>>, %arg2: memref<192x384xbf16, #tpu.memory_space<vmem>>, %arg3: memref<1x384xf32, #tpu.memory_space<vmem>>, %arg4: memref<1x32xf32, #tpu.memory_space<vmem>>, %arg5: memref<16x32xf32, #tpu.memory_space<vmem>>) attributes {dimension_semantics = [#tpu.dimension_semantics<parallel>], iteration_bounds = array<i64: 1>, scalar_prefetch = 0 : i64, scratch_operands = 0 : i64, tpu.core_type = #tpu.core_type<tc>, window_params = [{transform_indices = @transform_0, window_bounds = array<i64: 16, 192>}, {pipeline_mode = #tpu.pipeline_mode<synchronous>, transform_indices = @transform_1, window_bounds = array<i64: 192, 384>}, {pipeline_mode = #tpu.pipeline_mode<synchronous>, transform_indices = @transform_2, window_bounds = array<i64: 1, 384>}, {pipeline_mode = #tpu.pipeline_mode<synchronous>, transform_indices = @transform_3, window_bounds = array<i64: 1, 32>}, {transform_indices = @transform_4, window_bounds = array<i64: 16, 32>}]} {
    %c0 = arith.constant 0 : index
    %c0_0 = arith.constant 0 : index
    %0 = vector.load %arg1[%c0, %c0_0] : memref<16x192xbf16, #tpu.memory_space<vmem>>, vector<16x192xbf16>
    %c0_1 = arith.constant 0 : index
    %c0_2 = arith.constant 0 : index
    %1 = vector.load %arg2[%c0_1, %c0_2] : memref<192x384xbf16, #tpu.memory_space<vmem>>, vector<192x384xbf16>
    %cst = arith.constant dense<0.000000e+00> : vector<16x384xf32>
    %2 = tpu.matmul %0, %1, %cst {dimension_numbers = #tpu.dot_dimension_numbers<[1], [0], [0], [1], [0, 0, 1, 1], [], []>} : vector<16x192xbf16>, vector<192x384xbf16>, vector<16x384xf32> -> vector<16x384xf32>
    %c0_3 = arith.constant 0 : index
    %c0_4 = arith.constant 0 : index
    %3 = vector.load %arg3[%c0_3, %c0_4] : memref<1x384xf32, #tpu.memory_space<vmem>>, vector<1x384xf32>
    %4 = vector.broadcast %3 : vector<1x384xf32> to vector<16x384xf32>
    %5 = arith.addf %2, %4 : vector<16x384xf32>
    %6 = vector.extract_strided_slice %5 {offsets = [0, 0], sizes = [16, 128], strides = [1, 1]} : vector<16x384xf32> to vector<16x128xf32>
    %7 = vector.extract_strided_slice %5 {offsets = [0, 128], sizes = [16, 128], strides = [1, 1]} : vector<16x384xf32> to vector<16x128xf32>
    %8 = arith.maximumf %6, %7 : vector<16x128xf32>
    %9 = vector.extract_strided_slice %5 {offsets = [0, 256], sizes = [16, 128], strides = [1, 1]} : vector<16x384xf32> to vector<16x128xf32>
    %10 = arith.maximumf %8, %9 : vector<16x128xf32>
    %11 = vector.extract_strided_slice %10 {offsets = [0, 0], sizes = [16, 32], strides = [1, 1]} : vector<16x128xf32> to vector<16x32xf32>
    %12 = vector.extract_strided_slice %10 {offsets = [0, 32], sizes = [16, 32], strides = [1, 1]} : vector<16x128xf32> to vector<16x32xf32>
    %13 = arith.maximumf %11, %12 : vector<16x32xf32>
    %14 = vector.extract_strided_slice %10 {offsets = [0, 64], sizes = [16, 32], strides = [1, 1]} : vector<16x128xf32> to vector<16x32xf32>
    %15 = arith.maximumf %13, %14 : vector<16x32xf32>
    %16 = vector.extract_strided_slice %10 {offsets = [0, 96], sizes = [16, 32], strides = [1, 1]} : vector<16x128xf32> to vector<16x32xf32>
    %17 = arith.maximumf %15, %16 : vector<16x32xf32>
    %c0_5 = arith.constant 0 : index
    %c0_6 = arith.constant 0 : index
    %18 = vector.load %arg4[%c0_5, %c0_6] : memref<1x32xf32, #tpu.memory_space<vmem>>, vector<1x32xf32>
    %19 = vector.broadcast %18 : vector<1x32xf32> to vector<16x32xf32>
    %20 = arith.addf %17, %19 : vector<16x32xf32>
    %21 = math.tanh %20 : vector<16x32xf32>
    %c0_7 = arith.constant 0 : index
    %c0_8 = arith.constant 0 : index
    %22 = vector.load %arg5[%c0_7, %c0_8] : memref<16x32xf32, #tpu.memory_space<vmem>>, vector<16x32xf32>
    tpu.vector_store %arg5[%c0_7, %c0_8], %21 {strides = array<i32>} : memref<16x32xf32, #tpu.memory_space<vmem>>, vector<16x32xf32>,
    return
  }
  func.func @transform_0(%arg0: i32) -> (i32, i32) {
    %c0_i32 = arith.constant 0 : i32
    %c0_i32_0 = arith.constant 0 : i32
    return %arg0, %c0_i32 : i32, i32
  }
  func.func @transform_1(%arg0: i32) -> (i32, i32) {
    %c0_i32 = arith.constant 0 : i32
    %c0_i32_0 = arith.constant 0 : i32
    %c0_i32_1 = arith.constant 0 : i32
    return %c0_i32, %c0_i32_0 : i32, i32
  }
  func.func @transform_2(%arg0: i32) -> (i32, i32) {
    %c0_i32 = arith.constant 0 : i32
    %c0_i32_0 = arith.constant 0 : i32
    %c0_i32_1 = arith.constant 0 : i32
    return %c0_i32, %c0_i32_0 : i32, i32
  }
  func.func @transform_3(%arg0: i32) -> (i32, i32) {
    %c0_i32 = arith.constant 0 : i32
    %c0_i32_0 = arith.constant 0 : i32
    %c0_i32_1 = arith.constant 0 : i32
    return %c0_i32, %c0_i32_0 : i32, i32
  }
  func.func @transform_4(%arg0: i32) -> (i32, i32) {
    %c0_i32 = arith.constant 0 : i32
    %c0_i32_0 = arith.constant 0 : i32
    return %arg0, %c0_i32 : i32, i32
  }
}

</mosaic_0001>

<llo_original>
// kernel: tdnn_forward.1
$region0: #{tdnn_forward.1}
  #allocation0 [shape = 'u32[]', space=smem, size = 0x4, offset = 0x4, fixed_abs, tag = 'smem constant byte address 0x4 - core index']
  #allocation1 [shape = 'u32[144,128]{1,0:T(1,128)}', space=vmem, size = 0x12000, scoped, tag = 'internal scratch']
  %s0 = inlined_call_operand.vmem [shape: bf16[16,192], index: 0, kind: input, shape index: {}]
  %s1 = inlined_call_operand.vmem [shape: bf16[192,384], index: 1, kind: input, shape index: {}]
  %s2 = inlined_call_operand.vmem [shape: f32[1,384], index: 2, kind: input, shape index: {}]
  %s3 = inlined_call_operand.vmem [shape: f32[1,32], index: 3, kind: input, shape index: {}]
  %s4 = inlined_call_operand.hbm [shape: f32[16,32], index: 4, kind: output, shape index: {}]
  %s5 = sld [smem:[#allocation0]]
  $region26: #{tdnn_forward.1} parent=0
    _
  %s7 = ssub.s32 1, %s5
  %s8 = scalar_select 0, %s7, %s5
  $region1: #{tdnn_forward.1} parent=0
    #allocation2 [shape = 'u8[8192]{0}', space=vmem, size = 0x2000, scoped, tag = 'output window, operand 0, single buffered']
    #allocation3 [shape = 's32[1]{0}', space=sflag, size = 0x4, scoped, tag = 'scoped memory for tdnn_forward.1']
    %9 = vsyncpa [#allocation3], 0
    // Predicated region
    $region2: #{tdnn_forward.1} parent=1 // pred_check
      _
    $region3: #{tdnn_forward.1} parent=1 // pred_check_branch
      %11 = sbr.rel (0) target = $region5
    $region4: #{tdnn_forward.1} parent=1 // pred_region
      _
    $region5: #{tdnn_forward.1} parent=1 // pred_fallthru
      _
    // Predicated region
    $region6: #{tdnn_forward.1} parent=1 // pred_check
      _
    $region7: #{tdnn_forward.1} parent=1 // pred_check_branch
      %13 = sbr.rel (0) target = $region9
    $region8: #{tdnn_forward.1} parent=1 // pred_region
      _
    $region9: #{tdnn_forward.1} parent=1 // pred_fallthru
      _
    // Predicated region
    $region10: #{tdnn_forward.1} parent=1 // pred_check
      _
    $region11: #{tdnn_forward.1} parent=1 // pred_check_branch
      %15 = sbr.rel (0) target = $region13
    $region12: #{tdnn_forward.1} parent=1 // pred_region
      _
    $region13: #{tdnn_forward.1} parent=1 // pred_fallthru
      _
    // Predicated region
    $region14: #{tdnn_forward.1} parent=1 // pred_check
      _
    $region15: #{tdnn_forward.1} parent=1 // pred_check_branch
      %17 = sbr.rel (0) target = $region17
    $region16: #{tdnn_forward.1} parent=1 // pred_region
      _
    $region17: #{tdnn_forward.1} parent=1 // pred_fallthru
      _
    %v19 = vld [vmem:[%s0] sm:$0xff]
    %v20 = vld [vmem:[%s0 + $0x8] sm:$0xff]
    %v21 = vld [vmem:[%s1] sm:$0xff]
    %v22 = vld [vmem:[%s1 + $0x8] sm:$0xf]
    %v23 = vld [vmem:[%s1 + $0xc] sm:$0xff]
    %v24 = vld [vmem:[%s1 + $0x14] sm:$0xf]
    %v25 = vld [vmem:[%s1 + $0x18] sm:$0xff]
    %v26 = vld [vmem:[%s1 + $0x20] sm:$0xf]
    %v27 = vld [vmem:[%s1 + $0x24] sm:$0xff]
    %v28 = vld [vmem:[%s1 + $0x2c] sm:$0xf]
    %v29 = vld [vmem:[%s1 + $0x30] sm:$0xff]
    %v30 = vld [vmem:[%s1 + $0x38] sm:$0xf]
    %v31 = vld [vmem:[%s1 + $0x3c] sm:$0xff]
    %v32 = vld [vmem:[%s1 + $0x44] sm:$0xf]
    %v33 = vld [vmem:[%s1 + $0x48] sm:$0xff]
    %v34 = vld [vmem:[%s1 + $0x50] sm:$0xf]
    %v35 = vld [vmem:[%s1 + $0x54] sm:$0xff]
    %v36 = vld [vmem:[%s1 + $0x5c] sm:$0xf]
    %v37 = vld [vmem:[%s1 + $0x60] sm:$0xff]
    %v38 = vld [vmem:[%s1 + $0x68] sm:$0xf]
    %v39 = vld [vmem:[%s1 + $0x6c] sm:$0xff]
    %v40 = vld [vmem:[%s1 + $0x74] sm:$0xf]
    %v41 = vld [vmem:[%s1 + $0x78] sm:$0xff]
    %v42 = vld [vmem:[%s1 + $0x80] sm:$0xf]
    %v43 = vld [vmem:[%s1 + $0x84] sm:$0xff]
    %v44 = vld [vmem:[%s1 + $0x8c] sm:$0xf]
    %v45 = vld [vmem:[%s1 + $0x90] sm:$0xff]
    %v46 = vld [vmem:[%s1 + $0x98] sm:$0xf]
    %v47 = vld [vmem:[%s1 + $0x9c] sm:$0xff]
    %v48 = vld [vmem:[%s1 + $0xa4] sm:$0xf]
    %v49 = vld [vmem:[%s1 + $0xa8] sm:$0xff]
    %v50 = vld [vmem:[%s1 + $0xb0] sm:$0xf]
    %v51 = vld [vmem:[%s1 + $0xb4] sm:$0xff]
    %v52 = vld [vmem:[%s1 + $0xbc] sm:$0xf]
    %v53 = vld [vmem:[%s1 + $0xc0] sm:$0xff]
    %v54 = vld [vmem:[%s1 + $0xc8] sm:$0xf]
    %v55 = vld [vmem:[%s1 + $0xcc] sm:$0xff]
    %v56 = vld [vmem:[%s1 + $0xd4] sm:$0xf]
    %v57 = vld [vmem:[%s1 + $0xd8] sm:$0xff]
    %v58 = vld [vmem:[%s1 + $0xe0] sm:$0xf]
    %v59 = vld [vmem:[%s1 + $0xe4] sm:$0xff]
    %v60 = vld [vmem:[%s1 + $0xec] sm:$0xf]
    %v61 = vld [vmem:[%s1 + $0xf0] sm:$0xff]
    %v62 = vld [vmem:[%s1 + $0xf8] sm:$0xf]
    %v63 = vld [vmem:[%s1 + $0xfc] sm:$0xff]
    %v64 = vld [vmem:[%s1 + $0x104] sm:$0xf]
    %v65 = vld [vmem:[%s1 + $0x108] sm:$0xff]
    %v66 = vld [vmem:[%s1 + $0x110] sm:$0xf]
    %v67 = vld [vmem:[%s1 + $0x114] sm:$0xff]
    %v68 = vld [vmem:[%s1 + $0x11c] sm:$0xf]
    %v69 = vld [vmem:[%s2] sm:$0x7]
    %v71 = vlaneseq
    %v72 = vshrl.u32 %v71, 7
    %v73 = vsub.s32 0, %v72
    %v74 = vrot.slane %v69, %v73
    %v75 = vlaneseq
    %v76 = vshrl.u32 %v75, 7
    %v77 = vsub.s32 1, %v76
    %v78 = vrot.slane %v69, %v77
    %v79 = vlaneseq
    %v80 = vshrl.u32 %v79, 7
    %v81 = vsub.s32 2, %v80
    %v82 = vrot.slane %v69, %v81
    %v88 = vunpack.c.l.b16 %v19
    %v89 = vunpack.c.h.b16 %v19
    %v90 = vunpack.c.l.b16 %v20
    %v91 = vunpack.c.h.b16 %v20
    %v92 = vpack.c.b16 %v90, %v88
    %v93 = vpack.c.b16 %v91, %v89
    %v143 = vunpack.c.l.b16 %v21
    %v144 = vunpack.c.h.b16 %v21
    %v145 = vunpack.c.l.b16 %v22
    %v146 = vunpack.c.l.b16 %v23
    %v147 = vunpack.c.h.b16 %v23
    %v148 = vunpack.c.l.b16 %v24
    %v149 = vunpack.c.l.b16 %v25
    %v150 = vunpack.c.h.b16 %v25
    %v151 = vunpack.c.l.b16 %v26
    %v152 = vunpack.c.l.b16 %v27
    %v153 = vunpack.c.h.b16 %v27
    %v154 = vunpack.c.l.b16 %v28
    %v155 = vunpack.c.l.b16 %v29
    %v156 = vunpack.c.h.b16 %v29
    %v157 = vunpack.c.l.b16 %v30
    %v158 = vunpack.c.l.b16 %v31
    %v159 = vunpack.c.h.b16 %v31
    %v160 = vunpack.c.l.b16 %v32
    %v161 = vunpack.c.l.b16 %v33
    %v162 = vunpack.c.h.b16 %v33
    %v163 = vunpack.c.l.b16 %v34
    %v164 = vunpack.c.l.b16 %v35
    %v165 = vunpack.c.h.b16 %v35
    %v166 = vunpack.c.l.b16 %v36
    %v167 = vunpack.c.l.b16 %v37
    %v168 = vunpack.c.h.b16 %v37
    %v169 = vunpack.c.l.b16 %v38
    %v170 = vunpack.c.l.b16 %v39
    %v171 = vunpack.c.h.b16 %v39
    %v172 = vunpack.c.l.b16 %v40
    %v173 = vunpack.c.l.b16 %v41
    %v174 = vunpack.c.h.b16 %v41
    %v175 = vunpack.c.l.b16 %v42
    %v176 = vunpack.c.l.b16 %v43
    %v177 = vunpack.c.h.b16 %v43
    %v178 = vunpack.c.l.b16 %v44
    %v179 = vunpack.c.l.b16 %v45
    %v180 = vunpack.c.h.b16 %v45
    %v181 = vunpack.c.l.b16 %v46
    %v182 = vunpack.c.l.b16 %v47
    %v183 = vunpack.c.h.b16 %v47
    %v184 = vunpack.c.l.b16 %v48
    %v185 = vunpack.c.l.b16 %v49
    %v186 = vunpack.c.h.b16 %v49
    %v187 = vunpack.c.l.b16 %v50
    %v188 = vunpack.c.l.b16 %v51
    %v189 = vunpack.c.h.b16 %v51
    %v190 = vunpack.c.l.b16 %v52
    %v191 = vunpack.c.l.b16 %v53
    %v192 = vunpack.c.h.b16 %v53
    %v193 = vunpack.c.l.b16 %v54
    %v194 = vunpack.c.l.b16 %v55
    %v195 = vunpack.c.h.b16 %v55
    %v196 = vunpack.c.l.b16 %v56
    %v197 = vunpack.c.l.b16 %v57
    %v198 = vunpack.c.h.b16 %v57
    %v199 = vunpack.c.l.b16 %v58
    %v200 = vunpack.c.l.b16 %v59
    %v201 = vunpack.c.h.b16 %v59
    %v202 = vunpack.c.l.b16 %v60
    %v203 = vunpack.c.l.b16 %v61
    %v204 = vunpack.c.h.b16 %v61
    %v205 = vunpack.c.l.b16 %v62
    %v206 = vunpack.c.l.b16 %v63
    %v207 = vunpack.c.h.b16 %v63
    %v208 = vunpack.c.l.b16 %v64
    %v209 = vunpack.c.l.b16 %v65
    %v210 = vunpack.c.h.b16 %v65
    %v211 = vunpack.c.l.b16 %v66
    %v212 = vunpack.c.l.b16 %v67
    %v213 = vunpack.c.h.b16 %v67
    %v214 = vunpack.c.l.b16 %v68
    %v215 = vpack.c.b16 %v146, %v143
    %v216 = vpack.c.b16 %v147, %v144
    %v217 = vpack.c.b16 %v148, %v145
    %v218 = vpack.c.b16 %v152, %v149
    %v219 = vpack.c.b16 %v153, %v150
    %v220 = vpack.c.b16 %v154, %v151
    %v221 = vpack.c.b16 %v158, %v155
    %v222 = vpack.c.b16 %v159, %v156
    %v223 = vpack.c.b16 %v160, %v157
    %v224 = vpack.c.b16 %v164, %v161
    %v225 = vpack.c.b16 %v165, %v162
    %v226 = vpack.c.b16 %v166, %v163
    %v227 = vpack.c.b16 %v170, %v167
    %v228 = vpack.c.b16 %v171, %v168
    %v229 = vpack.c.b16 %v172, %v169
    %v230 = vpack.c.b16 %v176, %v173
    %v231 = vpack.c.b16 %v177, %v174
    %v232 = vpack.c.b16 %v178, %v175
    %v233 = vpack.c.b16 %v182, %v179
    %v234 = vpack.c.b16 %v183, %v180
    %v235 = vpack.c.b16 %v184, %v181
    %v236 = vpack.c.b16 %v188, %v185
    %v237 = vpack.c.b16 %v189, %v186
    %v238 = vpack.c.b16 %v190, %v187
    %v239 = vpack.c.b16 %v194, %v191
    %v240 = vpack.c.b16 %v195, %v192
    %v241 = vpack.c.b16 %v196, %v193
    %v242 = vpack.c.b16 %v200, %v197
    %v243 = vpack.c.b16 %v201, %v198
    %v244 = vpack.c.b16 %v202, %v199
    %v245 = vpack.c.b16 %v206, %v203
    %v246 = vpack.c.b16 %v207, %v204
    %v247 = vpack.c.b16 %v208, %v205
    %v248 = vpack.c.b16 %v212, %v209
    %v249 = vpack.c.b16 %v213, %v210
    %v250 = vpack.c.b16 %v214, %v211
    %vm287 = vcmask 523264
    %v289 = vsel %vm287, %v93, 0
    %291 = vmatprep.subr.bf16.mxu0 %v216
    %292 = vmatpush1.bf16.msra.mxu0 %v215
    %293 = vmatprep.subr.bf16.mxu0 %v219
    %294 = vmatpush1.bf16.msra.mxu0 %v218
    %295 = vmatprep.subr.bf16.mxu0 %v222
    %296 = vmatpush1.bf16.msra.mxu0 %v221
    %297 = vmatprep.subr.bf16.mxu0 %v225
    %298 = vmatpush1.bf16.msra.mxu0 %v224
    %299 = vmatprep.subr.bf16.mxu0 %v228
    %300 = vmatpush1.bf16.msra.mxu0 %v227
    %301 = vmatprep.subr.bf16.mxu0 %v231
    %302 = vmatpush1.bf16.msra.mxu0 %v230
    %303 = vmatprep.subr.bf16.mxu0 %v234
    %304 = vmatpush1.bf16.msra.mxu0 %v233
    %305 = vmatprep.subr.bf16.mxu0 %v237
    %306 = vmatpush1.bf16.msra.mxu0 %v236
    %307 = vmatprep.subr.bf16.mxu0 %v240
    %308 = vmatpush1.bf16.msra.mxu0 %v239
    %309 = vmatprep.subr.bf16.mxu0 %v243
    %310 = vmatpush1.bf16.msra.mxu0 %v242
    %311 = vmatprep.subr.bf16.mxu0 %v246
    %312 = vmatpush1.bf16.msra.mxu0 %v245
    %313 = vmatprep.subr.bf16.mxu0 %v249
    %314 = vmatpush1.bf16.msra.mxu0 %v248
    %315 = vmatprep.subr.bf16.mxu0 0
    %316 = vmatpush1.bf16.msra.mxu0 0
    %317 = vmatprep.subr.bf16.mxu0 0
    %318 = vmatpush1.bf16.msra.mxu0 0
    %319 = vmatprep.subr.bf16.mxu0 0
    %320 = vmatpush1.bf16.msra.mxu0 0
    %321 = vmatprep.subr.bf16.mxu0 0
    %322 = vmatpush1.bf16.msra.mxu0 0
    %323 = vmatprep.mubr.bf16.mxu0 %v289
    %324 = vmatmul.mubr.bf16.gmra.mrb[0].mxu0 %v92
    %v325 = vpop.f32.mrb[0].mxu0
    %v326 = vadd.f32 %v74, %v325
    %v327 = vpop.f32.mrb[0].mxu0
    %v328 = vadd.f32 %v78, %v327
    %v329 = vpop.f32.mrb[0].mxu0
    %v330 = vadd.f32 %v74, %v329
    %v331 = vpop.f32.mrb[0].mxu0
    %v332 = vadd.f32 %v78, %v331
    %333 = vdwg.mxu0
    %334 = vmatprep.subr.bf16.mxu0 0
    %335 = vmatpush1.bf16.msra.mxu0 %v217
    %336 = vmatprep.subr.bf16.mxu0 0
    %337 = vmatpush1.bf16.msra.mxu0 %v220
    %338 = vmatprep.subr.bf16.mxu0 0
    %339 = vmatpush1.bf16.msra.mxu0 %v223
    %340 = vmatprep.subr.bf16.mxu0 0
    %341 = vmatpush1.bf16.msra.mxu0 %v226
    %342 = vmatprep.subr.bf16.mxu0 0
    %343 = vmatpush1.bf16.msra.mxu0 %v229
    %344 = vmatprep.subr.bf16.mxu0 0
    %345 = vmatpush1.bf16.msra.mxu0 %v232
    %346 = vmatprep.subr.bf16.mxu0 0
    %347 = vmatpush1.bf16.msra.mxu0 %v235
    %348 = vmatprep.subr.bf16.mxu0 0
    %349 = vmatpush1.bf16.msra.mxu0 %v238
    %350 = vmatprep.subr.bf16.mxu0 0
    %351 = vmatpush1.bf16.msra.mxu0 %v241
    %352 = vmatprep.subr.bf16.mxu0 0
    %353 = vmatpush1.bf16.msra.mxu0 %v244
    %354 = vmatprep.subr.bf16.mxu0 0
    %355 = vmatpush1.bf16.msra.mxu0 %v247
    %356 = vmatprep.subr.bf16.mxu0 0
    %357 = vmatpush1.bf16.msra.mxu0 %v250
    %358 = vmatprep.subr.bf16.mxu0 0
    %359 = vmatpush1.bf16.msra.mxu0 0
    %360 = vmatprep.subr.bf16.mxu0 0
    %361 = vmatpush1.bf16.msra.mxu0 0
    %362 = vmatprep.subr.bf16.mxu0 0
    %363 = vmatpush1.bf16.msra.mxu0 0
    %364 = vmatprep.subr.bf16.mxu0 0
    %365 = vmatpush1.bf16.msra.mxu0 0
    %366 = vmatprep.mubr.bf16.mxu0 %v289
    %367 = vmatmul.mubr.bf16.gmra.mrb[0].mxu0 %v92
    %v368 = vpop.f32.mrb[0].mxu0
    %v369 = vadd.f32 %v82, %v368
    %v370 = vpop.f32.mrb[0].mxu0
    %v371 = vpop.f32.mrb[0].mxu0
    %v372 = vadd.f32 %v82, %v371
    %v373 = vpop.f32.mrb[0].mxu0
    %374 = vdwg.mxu0
    %v375 = vmax.f32 %v326, %v328
    %v376 = vmax.f32 %v330, %v332
    %v377 = vmax.f32 %v375, %v369
    %v378 = vmax.f32 %v376, %v372
    %381 = vrot.lane.b32.xlu0 %v377, 96
    %v382 = vpop.permute.xlu0 %381
    %383 = vrot.lane.b32.xlu0 %v378, 96
    %v384 = vpop.permute.xlu0 %383
    %v387 = vmax.f32 %v377, %v382
    %v388 = vmax.f32 %v378, %v384
    %389 = vrot.lane.b32.xlu0 %v377, 64
    %v390 = vpop.permute.xlu0 %389
    %391 = vrot.lane.b32.xlu0 %v378, 64
    %v392 = vpop.permute.xlu0 %391
    %v395 = vmax.f32 %v387, %v390
    %v396 = vmax.f32 %v388, %v392
    %397 = vrot.lane.b32.xlu0 %v377, 32
    %v398 = vpop.permute.xlu0 %397
    %399 = vrot.lane.b32.xlu0 %v378, 32
    %v400 = vpop.permute.xlu0 %399
    %v403 = vmax.f32 %v395, %v398
    %v404 = vmax.f32 %v396, %v400
    %v405 = vld [vmem:[%s3] sm:$0x1]
    %v407 = vlaneseq
    %v408 = vshrl.u32 %v407, 7
    %v409 = vsub.s32 0, %v408
    %v410 = vrot.slane %v405, %v409
    %v412 = vadd.f32 %v403, %v410
    %v413 = vadd.f32 %v404, %v410
    %v414 = vtanh.pop %v412
    %v415 = vtanh.pop %v413
    %vm416 = vcmask 261120
    %417 = vst.msk [vmem:[#allocation2] sm:$0xff] %vm416, %v414
    %418 = vst.msk [vmem:[#allocation2 + $0x8] sm:$0xff] %vm416, %v415
    // Predicated region
    $region18: #{tdnn_forward.1} parent=1 // pred_check
      _
    $region19: #{tdnn_forward.1} parent=1 // pred_check_branch
      %420 = sbr.rel (0) target = $region21
    $region20: #{tdnn_forward.1} parent=1 // pred_region
      %s422 = ssub.s32 256, 256
      %423 = vsyncadd [#allocation3], %s422
      %s424 = sshll.u32 [#allocation2], 4
      %s425 = int_to_ptr.vmem [resolvable:$true] %s424
      %430 = dma.vmem_to_hbm [thread:$0]  %s425, 256, %s4, [#allocation3], 128, 128, 8
    $region21: #{tdnn_forward.1} parent=1 // pred_fallthru
      _
    // Predicated region
    $region22: #{tdnn_forward.1} parent=1 // pred_check
      _
    $region23: #{tdnn_forward.1} parent=1 // pred_check_branch
      %432 = sbr.rel (0) target = $region25
    $region24: #{tdnn_forward.1} parent=1 // pred_region
      %433 = dma.done [#allocation3], 256
    $region25: #{tdnn_forward.1} parent=1 // pred_fallthru
      _
    %434 = vsyncpa [#allocation3], 1

</llo_original>
